<compile_context>
chip_gen: v7x
topology: tpu7x:2x2x1
jax: 0.10.0
libtpu: 0.0.40
codegen_flags: <defaults>
</compile_context>

<pallas_src>
import jax
import jax.numpy as jnp
from jax.experimental import pallas as pl
from jax.experimental.pallas import tpu as pltpu

_LANES = 128
_SUBLANES = 8
_VREG = _LANES * _SUBLANES        # 1024 f32 elements per (8,128) subtile
_SPLITS = 2                       # leading "parallel" grid axis (2 TCs on v7x)
_MAX_BLOCK_SUBTILES = 512         # 512 * 4 KiB = 2 MiB f32 per input tile


def _sum_kernel_pair(a_ref, b_ref, oa_ref, ob_ref):
    """Accumulate per-lane partial sums of two equally-shaped streams."""
    r = pl.program_id(1)

    @pl.when(r == 0)
    def _init():
        oa_ref[...] = jnp.zeros_like(oa_ref)
        ob_ref[...] = jnp.zeros_like(ob_ref)

    # (block, 8, 128) -> (8, 128): pure VPU vreg adds, hidden under the DMA.
    oa_ref[...] += jnp.sum(a_ref[...], axis=0)[None]
    ob_ref[...] += jnp.sum(b_ref[...], axis=0)[None]


def _sum_kernel_single(a_ref, oa_ref):
    """Accumulate per-lane partial sums of a single stream (kl_var=None path)."""
    r = pl.program_id(1)

    @pl.when(r == 0)
    def _init():
        oa_ref[...] = jnp.zeros_like(oa_ref)

    oa_ref[...] += jnp.sum(a_ref[...], axis=0)[None]


def _layout(x, max_block_subtiles):
    """Flatten + zero-pad to a lane-dense (subtiles, 8, 128) slab.

    Returns (array, num_blocks_per_split, block_subtiles).
    Padding is with zeros (neutral for the sum); the true element count is
    used for the mean in the wrapper, never the padded count.
    """
    x = jnp.asarray(x, jnp.float32).reshape(-1)
    n = int(x.shape[0])
    subtiles = max(1, -(-n // _VREG))
    per_split = -(-subtiles // _SPLITS)
    block = max(1, min(max_block_subtiles, per_split))
    per_split = -(-per_split // block) * block          # multiple of block
    total = _SPLITS * per_split * _VREG
    if total != n:
        x = jnp.pad(x, (0, total - n))
    return x.reshape(_SPLITS * per_split, _SUBLANES, _LANES), per_split // block, block


def _pallas_total_sums(arrays, max_block_subtiles=_MAX_BLOCK_SUBTILES):
    """Return [sum(a) for a in arrays] (1 or 2 arrays of equal element count)
    via a single tiled, pipelined Pallas reduction."""
    laid = [_layout(a, max_block_subtiles) for a in arrays]
    ins = [t[0] for t in laid]
    nblocks, block = laid[0][1], laid[0][2]
    n_in = len(ins)

    def in_map(c, r):
        return (c * nblocks + r, 0, 0)

    def out_map(c, r):        # same block across the reduction axis -> accumulator
        return (c, 0, 0)

    in_spec = pl.BlockSpec((block, _SUBLANES, _LANES), in_map)
    out_spec = pl.BlockSpec((1, _SUBLANES, _LANES), out_map)
    out_shape = jax.ShapeDtypeStruct((_SPLITS, _SUBLANES, _LANES), jnp.float32)

    if n_in == 1:
        kernel = _sum_kernel_single
        out_shapes, out_specs = out_shape, out_spec
    else:
        kernel = _sum_kernel_pair
        out_shapes, out_specs = (out_shape, out_shape), (out_spec, out_spec)

    outs = pl.pallas_call(
        kernel,
        out_shape=out_shapes,
        grid_spec=pltpu.PrefetchScalarGridSpec(
            num_scalar_prefetch=0,
            grid=(_SPLITS, nblocks),
            in_specs=[in_spec] * n_in,
            out_specs=out_specs,
        ),
        compiler_params=pltpu.CompilerParams(
            dimension_semantics=("parallel", "arbitrary"),
            vmem_limit_bytes=32 * 1024 * 1024,
        ),
    )(*ins)

    if n_in == 1:
        outs = (outs,)
    # Single cross-lane collapse of the tiny (2, 8, 128) partial-sum slabs.
    return [jnp.sum(o) for o in outs]


class KLLoss:
    """JAX/Pallas port of rllib KLLoss (trust-region / regularization modes)."""

    def __init__(self, epsilon_mean=0.0, epsilon_var=0.0, regularization=False):
        self.separated_kl = epsilon_var is not None
        if epsilon_var is None:
            epsilon_var = 0.0
        self.regularization = regularization
        if self.regularization:
            # Constant(eta) parameters; epsilons are zero.
            self.eta_mean = float(epsilon_mean)
            self.eta_var = float(epsilon_var)
            self.epsilon_mean = 0.0
            self.epsilon_var = 0.0
        else:
            # Learnable(1.0, positive=True)() == 1.0 at init.
            # TODO(synk): eta is a learnable (softplus) parameter in torch; only
            # its forward value (1.0 at init) is reproduced here.
            self.eta_mean = 1.0
            self.eta_var = 1.0
            self.epsilon_mean = float(epsilon_mean)
            self.epsilon_var = float(epsilon_var)

    def __call__(self, kl_mean, kl_var=None):
        # Plain-Python constant comparison (no device sync); would need rework
        # if epsilon/eta ever become traced parameters.
        if self.epsilon_mean == 0.0 and not self.regularization:
            zero = jnp.float32(0.0)
            return {"dual_loss": zero, "reg_loss": zero}

        kl_mean = jnp.asarray(kl_mean, jnp.float32)
        n_mean = int(kl_mean.size)

        if kl_var is None:
            # Skip streaming a synthetic zeros tensor through HBM.
            (sum_mean,) = _pallas_total_sums([kl_mean])
            km = sum_mean * (1.0 / n_mean)
            kv = jnp.float32(0.0)
        else:
            kl_var = jnp.asarray(kl_var, jnp.float32)
            n_var = int(kl_var.size)
            if n_var == n_mean:
                sum_mean, sum_var = _pallas_total_sums([kl_mean, kl_var])
            else:
                (sum_mean,) = _pallas_total_sums([kl_mean])
                (sum_var,) = _pallas_total_sums([kl_var])
            km = sum_mean * (1.0 / n_mean)
            kv = sum_var * (1.0 / n_var)

        # Scalar combination in the wrapper (removes SMEM params input).
        reg_loss = self.eta_mean * km + self.eta_var * kv

        if self.regularization:
            return {"dual_loss": jnp.float32(0.0), "reg_loss": reg_loss}

        if self.separated_kl:
            dual_loss = (self.eta_mean * (self.epsilon_mean - km)
                         + self.eta_var * (self.epsilon_var - kv))
        else:
            dual_loss = self.eta_mean * (self.epsilon_mean - km)
        return {"dual_loss": dual_loss, "reg_loss": reg_loss}


if __name__ == "__main__":
    key = jax.random.PRNGKey(0)
    k1, k2, k3 = jax.random.split(key, 3)

    # Small module-consistent shapes: per-sample KL divergences [batch, dim]
    # (deliberately not a multiple of 8x128 to exercise the padding path).
    kl_mean = jax.random.uniform(k1, (37, 19), dtype=jnp.float32) * 0.1
    kl_var = jax.random.uniform(k2, (37, 19), dtype=jnp.float32) * 0.01

    # Trust-region mode, separated KL.
    loss_mod = KLLoss(epsilon_mean=0.1, epsilon_var=1e-4, regularization=False)
    out = loss_mod(kl_mean, kl_var)
    out = jax.tree_util.tree_map(jax.block_until_ready, out)

    km = jnp.mean(kl_mean)
    kv = jnp.mean(kl_var)
    reg_ref = 1.0 * km + 1.0 * kv
    dual_ref = 1.0 * (0.1 - km) + 1.0 * (1e-4 - kv)
    assert jnp.allclose(out["reg_loss"], reg_ref, rtol=1e-5, atol=1e-6)
    assert jnp.allclose(out["dual_loss"], dual_ref, rtol=1e-5, atol=1e-6)

    # kl_var=None path (single-input kernel, no zero tensor streamed).
    loss_mod2 = KLLoss(epsilon_mean=0.05, epsilon_var=None, regularization=False)
    out2 = loss_mod2(kl_mean)
    out2 = jax.tree_util.tree_map(jax.block_until_ready, out2)
    assert jnp.allclose(out2["reg_loss"], km, rtol=1e-5, atol=1e-6)
    assert jnp.allclose(out2["dual_loss"], 0.05 - km, rtol=1e-5, atol=1e-6)

    # Regularization mode.
    loss_mod3 = KLLoss(epsilon_mean=0.3, epsilon_var=0.2, regularization=True)
    out3 = loss_mod3(kl_mean, kl_var)
    out3 = jax.tree_util.tree_map(jax.block_until_ready, out3)
    assert jnp.allclose(out3["reg_loss"], 0.3 * km + 0.2 * kv, rtol=1e-5, atol=1e-6)
    assert jnp.allclose(out3["dual_loss"], 0.0)

    # Exercise the multi-step accumulation path (force tiny blocks so the
    # reduction grid axis has >1 step per split).
    big = jax.random.uniform(k3, (8, 16, 128), dtype=jnp.float32)  # 16 subtiles
    (s,) = _pallas_total_sums([big], max_block_subtiles=2)          # grid (2, 4)
    s = jax.block_until_ready(s)
    assert jnp.allclose(s, jnp.sum(big), rtol=1e-4, atol=1e-3)

    print("KERNEL_OK")
</pallas_src>

<mosaic_0001>
module attributes {stable_mosaic.version = 11 : i64} {
  func.func @_sum_kernel_pair(%arg0: i32, %arg1: i32, %arg2: memref<1x8x128xf32, #tpu.memory_space<vmem>>, %arg3: memref<1x8x128xf32, #tpu.memory_space<vmem>>, %arg4: memref<1x8x128xf32, #tpu.memory_space<vmem>>, %arg5: memref<1x8x128xf32, #tpu.memory_space<vmem>>) attributes {dimension_semantics = [#tpu.dimension_semantics<parallel>, #tpu.dimension_semantics<arbitrary>], iteration_bounds = array<i64: 2, 1>, scalar_prefetch = 0 : i64, scratch_operands = 0 : i64, tpu.core_type = #tpu.core_type<tc>, window_params = [{transform_indices = @transform_0, window_bounds = array<i64: 1, 8, 128>}, {transform_indices = @transform_1, window_bounds = array<i64: 1, 8, 128>}, {transform_indices = @transform_2, window_bounds = array<i64: 1, 8, 128>}, {transform_indices = @transform_3, window_bounds = array<i64: 1, 8, 128>}]} {
    %c0_i32 = arith.constant 0 : i32
    %0 = arith.cmpi eq, %arg1, %c0_i32 : i32
    %1 = arith.extui %0 : i1 to i32
    %c0_i32_0 = arith.constant 0 : i32
    %2 = arith.cmpi ne, %1, %c0_i32_0 : i32
    scf.if %2 {
      %cst_19 = arith.constant 0.000000e+00 : f32
      %15 = vector.broadcast %cst_19 : f32 to vector<1x8x128xf32>
      %c0_20 = arith.constant 0 : index
      %c0_21 = arith.constant 0 : index
      %c0_22 = arith.constant 0 : index
      %16 = vector.load %arg4[%c0_20, %c0_21, %c0_22] : memref<1x8x128xf32, #tpu.memory_space<vmem>>, vector<1x8x128xf32>
      tpu.vector_store %arg4[%c0_20, %c0_21, %c0_22], %15 {strides = array<i32>} : memref<1x8x128xf32, #tpu.memory_space<vmem>>, vector<1x8x128xf32>,
      %cst_23 = arith.constant 0.000000e+00 : f32
      %17 = vector.broadcast %cst_23 : f32 to vector<1x8x128xf32>
      %c0_24 = arith.constant 0 : index
      %c0_25 = arith.constant 0 : index
      %c0_26 = arith.constant 0 : index
      %18 = vector.load %arg5[%c0_24, %c0_25, %c0_26] : memref<1x8x128xf32, #tpu.memory_space<vmem>>, vector<1x8x128xf32>
      tpu.vector_store %arg5[%c0_24, %c0_25, %c0_26], %17 {strides = array<i32>} : memref<1x8x128xf32, #tpu.memory_space<vmem>>, vector<1x8x128xf32>,
    } else {
    }
    %c0 = arith.constant 0 : index
    %c0_1 = arith.constant 0 : index
    %c0_2 = arith.constant 0 : index
    %3 = vector.load %arg4[%c0, %c0_1, %c0_2] : memref<1x8x128xf32, #tpu.memory_space<vmem>>, vector<1x8x128xf32>
    %c0_3 = arith.constant 0 : index
    %c0_4 = arith.constant 0 : index
    %c0_5 = arith.constant 0 : index
    %4 = vector.load %arg2[%c0_3, %c0_4, %c0_5] : memref<1x8x128xf32, #tpu.memory_space<vmem>>, vector<1x8x128xf32>
    %cst = arith.constant dense<0.000000e+00> : vector<8x128xf32>
    %5 = vector.multi_reduction <add>, %4, %cst [0] : vector<1x8x128xf32> to vector<8x128xf32>
    %6 = vector.shape_cast %5 : vector<8x128xf32> to vector<1x8x128xf32>
    %7 = arith.addf %3, %6 : vector<1x8x128xf32>
    %c0_6 = arith.constant 0 : index
    %c0_7 = arith.constant 0 : index
    %c0_8 = arith.constant 0 : index
    %8 = vector.load %arg4[%c0_6, %c0_7, %c0_8] : memref<1x8x128xf32, #tpu.memory_space<vmem>>, vector<1x8x128xf32>
    tpu.vector_store %arg4[%c0_6, %c0_7, %c0_8], %7 {strides = array<i32>} : memref<1x8x128xf32, #tpu.memory_space<vmem>>, vector<1x8x128xf32>,
    %c0_9 = arith.constant 0 : index
    %c0_10 = arith.constant 0 : index
    %c0_11 = arith.constant 0 : index
    %9 = vector.load %arg5[%c0_9, %c0_10, %c0_11] : memref<1x8x128xf32, #tpu.memory_space<vmem>>, vector<1x8x128xf32>
    %c0_12 = arith.constant 0 : index
    %c0_13 = arith.constant 0 : index
    %c0_14 = arith.constant 0 : index
    %10 = vector.load %arg3[%c0_12, %c0_13, %c0_14] : memref<1x8x128xf32, #tpu.memory_space<vmem>>, vector<1x8x128xf32>
    %cst_15 = arith.constant dense<0.000000e+00> : vector<8x128xf32>
    %11 = vector.multi_reduction <add>, %10, %cst_15 [0] : vector<1x8x128xf32> to vector<8x128xf32>
    %12 = vector.shape_cast %11 : vector<8x128xf32> to vector<1x8x128xf32>
    %13 = arith.addf %9, %12 : vector<1x8x128xf32>
    %c0_16 = arith.constant 0 : index
    %c0_17 = arith.constant 0 : index
    %c0_18 = arith.constant 0 : index
    %14 = vector.load %arg5[%c0_16, %c0_17, %c0_18] : memref<1x8x128xf32, #tpu.memory_space<vmem>>, vector<1x8x128xf32>
    tpu.vector_store %arg5[%c0_16, %c0_17, %c0_18], %13 {strides = array<i32>} : memref<1x8x128xf32, #tpu.memory_space<vmem>>, vector<1x8x128xf32>,
    return
  }
  func.func @transform_0(%arg0: i32, %arg1: i32) -> (i32, i32, i32) {
    %c1_i32 = arith.constant 1 : i32
    %0 = arith.muli %arg0, %c1_i32 : i32
    %1 = arith.addi %0, %arg1 : i32
    %c0_i32 = arith.constant 0 : i32
    %c0_i32_0 = arith.constant 0 : i32
    %c0_i32_1 = arith.constant 0 : i32
    return %1, %c0_i32, %c0_i32_0 : i32, i32, i32
  }
  func.func @transform_1(%arg0: i32, %arg1: i32) -> (i32, i32, i32) {
    %c1_i32 = arith.constant 1 : i32
    %0 = arith.muli %arg0, %c1_i32 : i32
    %1 = arith.addi %0, %arg1 : i32
    %c0_i32 = arith.constant 0 : i32
    %c0_i32_0 = arith.constant 0 : i32
    %c0_i32_1 = arith.constant 0 : i32
    return %1, %c0_i32, %c0_i32_0 : i32, i32, i32
  }
  func.func @transform_2(%arg0: i32, %arg1: i32) -> (i32, i32, i32) {
    %c0_i32 = arith.constant 0 : i32
    %c0_i32_0 = arith.constant 0 : i32
    %c0_i32_1 = arith.constant 0 : i32
    return %arg0, %c0_i32, %c0_i32_0 : i32, i32, i32
  }
  func.func @transform_3(%arg0: i32, %arg1: i32) -> (i32, i32, i32) {
    %c0_i32 = arith.constant 0 : i32
    %c0_i32_0 = arith.constant 0 : i32
    %c0_i32_1 = arith.constant 0 : i32
    return %arg0, %c0_i32, %c0_i32_0 : i32, i32, i32
  }
}

</mosaic_0001>

<llo_original>
// kernel: tpu_custom_call.1
$region0: #{tpu_custom_call.1}
  #allocation0 [shape = 'u32[]', space=smem, size = 0x4, offset = 0x4, fixed_abs, tag = 'smem constant byte address 0x4 - core index']
  #allocation1 [shape = 'u32[144,128]{1,0:T(1,128)}', space=vmem, size = 0x12000, scoped, tag = 'internal scratch']
  %s0 = inlined_call_operand.hbm [shape: f32[2,8,128], index: 0, kind: input, shape index: {}]
  %s1 = inlined_call_operand.hbm [shape: f32[2,8,128], index: 1, kind: input, shape index: {}]
  %s2 = inlined_call_operand.hbm [shape: f32[2,8,128], index: 2, kind: output, shape index: {0}]
  %s3 = inlined_call_operand.hbm [shape: f32[2,8,128], index: 3, kind: output, shape index: {1}]
  %4 = xla_tuple %s2, %s3
  %s5 = sld [smem:[#allocation0]]
  $region61: #{tpu_custom_call.1} parent=0
    _
  %s7 = ssub.s32 1, %s5
  %s8 = scalar_select 0, %s7, %s5
  $region1: #{tpu_custom_call.1} parent=0
    #allocation2 [shape = 'u8[8192]{0}', space=vmem, size = 0x2000, scoped, tag = 'input window, operand 0']
    #allocation3 [shape = 's32[2]{0}', space=sflag, size = 0x8, scoped, tag = 'scoped memory for tpu_custom_call.1']
    #allocation4 [shape = 's32[2]{0}', space=sflag, size = 0x8, scoped, tag = 'scoped memory for tpu_custom_call.1']
    #allocation5 [shape = 'u8[8192]{0}', space=vmem, size = 0x2000, scoped, tag = 'input window, operand 1']
    #allocation6 [shape = 's32[2]{0}', space=sflag, size = 0x8, scoped, tag = 'scoped memory for tpu_custom_call.1']
    #allocation7 [shape = 'u8[8192]{0}', space=vmem, size = 0x2000, scoped, tag = 'output window, operand 0']
    #allocation8 [shape = 'u8[8192]{0}', space=vmem, size = 0x2000, scoped, tag = 'output window, operand 1']
    #allocation9 [shape = 's32[2]{0}', space=sflag, size = 0x8, scoped, tag = 'scoped memory for tpu_custom_call.1']
    %9 = vsyncpa [#allocation3], 0
    %s10 = scalar_lea.sflag [#allocation3], 1
    %11 = vsyncpa %s10, 0
    %12 = vsyncpa [#allocation6], 0
    %s13 = scalar_lea.sflag [#allocation6], 1
    %14 = vsyncpa %s13, 0
    %15 = vsyncpa [#allocation4], 0
    %s16 = scalar_lea.sflag [#allocation4], 1
    %17 = vsyncpa %s16, 0
    %18 = vsyncpa [#allocation9], 0
    %s19 = scalar_lea.sflag [#allocation9], 1
    %20 = vsyncpa %s19, 0
    loop: start=0, step=1, limit=4
    $region2: #{tpu_custom_call.1} parent=1 // loop_pre_header
      _
    $region3: #{tpu_custom_call.1} parent=1 // loop_header
      %s22 = sphi 0, %s26
      %p23 = scmp.ge.s32.totalorder %s22, 4
      %s29 = sphi 0, %s41
      %s30 = sphi 0, %s37
      %s31 = sphi 0, %s29
      %s32 = sphi 0, %s30
      %s33 = sphi 0, %s31
      %s34 = sphi 0, %s32
      %s46 = sphi 0, %s48
      %s49 = sphi 0, %s46
      %s50 = sphi 0, %s49
      %s66 = sphi 0, %s50
      %s74 = sphi 0, %s76
      %s77 = sphi 0, %s74
      %s78 = sphi 0, %s77
      %s94 = sphi 0, %s78
      %s100 = sphi 0, %s102
      %s103 = sphi 0, %s100
      %s104 = sphi 0, %s103
      %s120 = sphi 0, %s104
      %s126 = sphi 0, %s128
      %s129 = sphi 0, %s126
      %s130 = sphi 0, %s129
      %s146 = sphi 0, %s130
    $region4: #{tpu_custom_call.1} parent=1 // loop_header_branch
      %25 = sbr.rel (%p23) target = $region8
    $region5: #{tpu_custom_call.1} parent=1 // loop_body
      %s27 = ssub.s32 %s22, 1
      %s28 = ssub.s32 %s22, 2
      %s35 = sadd.s32 1, %s30
      %p36 = scmp.ge.s32.totalorder %s35, 1
      %s37 = scalar_select %p36, 0, %s35
      %s38 = sadd.s32 1, %s29
      %s39 = scalar_select %p36, %s38, %s29
      %p40 = scmp.ge.s32.totalorder %s39, 2
      %s41 = scalar_select %p40, 0, %s39
      %s42 = sadd.s32 %s29, %s30
      %s43 = sadd.s32 %s41, %s37
      %s44 = ssub.s32 %s42, %s43
      %p45 = scmp.eq.s32.totalorder %s44, 0
      %s47 = sadd.s32 %s46, 1
      %s48 = scalar_select %p45, %s46, %s47
      %p51 = pneg %p45
      %p52 = scmp.eq.s32.totalorder %s22, 1
      %p53 = por %p51, %p52
      %p54 = scmp.ne.s32.totalorder %s46, %s49
      %p55 = scmp.eq.s32.totalorder %s22, 0
      %p56 = por %p54, %p55
      %p57 = scmp.ne.s32.totalorder %s46, %s49
      %p58 = scmp.eq.s32.totalorder %s27, 1
      %p59 = por %p57, %p58
      %p60 = scmp.ne.s32.totalorder %s49, %s50
      %p61 = scmp.eq.s32.totalorder %s27, 0
      %p62 = por %p60, %p61
      %p63 = scmp.ne.s32.totalorder %s49, %s50
      %p64 = scmp.eq.s32.totalorder %s28, 1
      %p65 = por %p63, %p64
      %p67 = scmp.ne.s32.totalorder %s50, %s66
      %p68 = scmp.eq.s32.totalorder %s28, 0
      %p69 = por %p67, %p68
      %s70 = sadd.s32 %s29, %s30
      %s71 = sadd.s32 %s41, %s37
      %s72 = ssub.s32 %s70, %s71
      %p73 = scmp.eq.s32.totalorder %s72, 0
      %s75 = sadd.s32 %s74, 1
      %s76 = scalar_select %p73, %s74, %s75
      %p79 = pneg %p73
      %p80 = scmp.eq.s32.totalorder %s22, 1
      %p81 = por %p79, %p80
      %p82 = scmp.ne.s32.totalorder %s74, %s77
      %p83 = scmp.eq.s32.totalorder %s22, 0
      %p84 = por %p82, %p83
      %p85 = scmp.ne.s32.totalorder %s74, %s77
      %p86 = scmp.eq.s32.totalorder %s27, 1
      %p87 = por %p85, %p86
      %p88 = scmp.ne.s32.totalorder %s77, %s78
      %p89 = scmp.eq.s32.totalorder %s27, 0
      %p90 = por %p88, %p89
      %p91 = scmp.ne.s32.totalorder %s77, %s78
      %p92 = scmp.eq.s32.totalorder %s28, 1
      %p93 = por %p91, %p92
      %p95 = scmp.ne.s32.totalorder %s78, %s94
      %p96 = scmp.eq.s32.totalorder %s28, 0
      %p97 = por %p95, %p96
      %s98 = ssub.s32 %s29, %s41
      %p99 = scmp.eq.s32.totalorder %s98, 0
      %s101 = sadd.s32 %s100, 1
      %s102 = scalar_select %p99, %s100, %s101
      %p105 = pneg %p99
      %p106 = scmp.eq.s32.totalorder %s22, 1
      %p107 = por %p105, %p106
      %p108 = scmp.ne.s32.totalorder %s100, %s103
      %p109 = scmp.eq.s32.totalorder %s22, 0
      %p110 = por %p108, %p109
      %p111 = scmp.ne.s32.totalorder %s100, %s103
      %p112 = scmp.eq.s32.totalorder %s27, 1
      %p113 = por %p111, %p112
      %p114 = scmp.ne.s32.totalorder %s103, %s104
      %p115 = scmp.eq.s32.totalorder %s27, 0
      %p116 = por %p114, %p115
      %p117 = scmp.ne.s32.totalorder %s103, %s104
      %p118 = scmp.eq.s32.totalorder %s28, 1
      %p119 = por %p117, %p118
      %p121 = scmp.ne.s32.totalorder %s104, %s120
      %p122 = scmp.eq.s32.totalorder %s28, 0
      %p123 = por %p121, %p122
      %s124 = ssub.s32 %s29, %s41
      %p125 = scmp.eq.s32.totalorder %s124, 0
      %s127 = sadd.s32 %s126, 1
      %s128 = scalar_select %p125, %s126, %s127
      %p131 = pneg %p125
      %p132 = scmp.eq.s32.totalorder %s22, 1
      %p133 = por %p131, %p132
      %p134 = scmp.ne.s32.totalorder %s126, %s129
      %p135 = scmp.eq.s32.totalorder %s22, 0
      %p136 = por %p134, %p135
      %p137 = scmp.ne.s32.totalorder %s126, %s129
      %p138 = scmp.eq.s32.totalorder %s27, 1
      %p139 = por %p137, %p138
      %p140 = scmp.ne.s32.totalorder %s129, %s130
      %p141 = scmp.eq.s32.totalorder %s27, 0
      %p142 = por %p140, %p141
      %p143 = scmp.ne.s32.totalorder %s129, %s130
      %p144 = scmp.eq.s32.totalorder %s28, 1
      %p145 = por %p143, %p144
      %p147 = scmp.ne.s32.totalorder %s130, %s146
      %p148 = scmp.eq.s32.totalorder %s28, 0
      %p149 = por %p147, %p148
      %p150 = scmp.le.s32.totalorder 1, %s22
      %p151 = scmp.lt.s32.totalorder %s22, 3
      %p152 = pnand %p150, %p151
      %p153 = pneg %p152
      // Predicated region
      $region9: #{tpu_custom_call.1} parent=5 // pred_check
        _
      $region10: #{tpu_custom_call.1} parent=5 // pred_check_branch
        %155 = sbr.rel (%p152) target = $region12
      $region11: #{tpu_custom_call.1} parent=5 // pred_region
        %s156 = ssub.s32 %s22, 1
      $region12: #{tpu_custom_call.1} parent=5 // pred_fallthru
        _
      %p157 = scmp.lt.s32.totalorder %s22, 2
      // Predicated region
      $region13: #{tpu_custom_call.1} parent=5 // pred_check
        %p158 = pneg %p157
      $region14: #{tpu_custom_call.1} parent=5 // pred_check_branch
        %160 = sbr.rel (%p158) target = $region16
      $region15: #{tpu_custom_call.1} parent=5 // pred_region
        // Predicated region
        $region17: #{tpu_custom_call.1} parent=15 // pred_check
          %p161 = pneg %p56
        $region18: #{tpu_custom_call.1} parent=15 // pred_check_branch
          %163 = sbr.rel (%p161) target = $region20
        $region19: #{tpu_custom_call.1} parent=15 // pred_region
          %s164 = sand.u32 %s46, 1
          %s165 = scalar_lea.sflag [#allocation3], %s164
          %s166 = sand.u32 %s46, 1
          %s167 = smul.addr %s166, 8
          %s168 = scalar_lea.vmem [#allocation2], %s167
          %s169 = sadd.s32 %s29, %s30
          %s171 = ssub.s32 128, 128
          %172 = vsyncadd %s165, %s171
          %s173 = smul.addr %s169, 128
          %s174 = scalar_lea.hbm %s0, %s173
          %s176 = sshll.u32 %s168, 4
          %s177 = int_to_ptr.vmem [resolvable:$true] %s176
          %179 = dma.hbm_to_vmem [thread:$0]  %s174, 128, %s177, %s165
        $region20: #{tpu_custom_call.1} parent=15 // pred_fallthru
          _
        // Predicated region
        $region21: #{tpu_custom_call.1} parent=15 // pred_check
          %p180 = pneg %p84
        $region22: #{tpu_custom_call.1} parent=15 // pred_check_branch
          %182 = sbr.rel (%p180) target = $region24
        $region23: #{tpu_custom_call.1} parent=15 // pred_region
          %s183 = sand.u32 %s74, 1
          %s184 = scalar_lea.sflag [#allocation6], %s183
          %s185 = sand.u32 %s74, 1
          %s186 = smul.addr %s185, 8
          %s187 = scalar_lea.vmem [#allocation5], %s186
          %s188 = sadd.s32 %s29, %s30
          %s190 = ssub.s32 128, 128
          %191 = vsyncadd %s184, %s190
          %s192 = smul.addr %s188, 128
          %s193 = scalar_lea.hbm %s1, %s192
          %s195 = sshll.u32 %s187, 4
          %s196 = int_to_ptr.vmem [resolvable:$true] %s195
          %198 = dma.hbm_to_vmem [thread:$0]  %s193, 128, %s196, %s184
        $region24: #{tpu_custom_call.1} parent=15 // pred_fallthru
          _
      $region16: #{tpu_custom_call.1} parent=5 // pred_fallthru
        _
      %p199 = scmp.le.s32.totalorder 1, %s22
      %p200 = scmp.lt.s32.totalorder %s22, 3
      %p201 = pnand %p199, %p200
      %p202 = pneg %p201
      // Predicated region
      $region25: #{tpu_custom_call.1} parent=5 // pred_check
        _
      $region26: #{tpu_custom_call.1} parent=5 // pred_check_branch
        %204 = sbr.rel (%p201) target = $region28
      $region27: #{tpu_custom_call.1} parent=5 // pred_region
        %s205 = ssub.s32 %s22, 1
        %s206 = sand.u32 %s49, 1
        %s207 = scalar_lea.sflag [#allocation3], %s206
        %s208 = sand.u32 %s49, 1
        %s209 = smul.addr %s208, 8
        %s210 = scalar_lea.vmem [#allocation2], %s209
        // Predicated region
        $region29: #{tpu_custom_call.1} parent=27 // pred_check
          %p211 = pneg %p62
        $region30: #{tpu_custom_call.1} parent=27 // pred_check_branch
          %213 = sbr.rel (%p211) target = $region32
        $region31: #{tpu_custom_call.1} parent=27 // pred_region
          %214 = dma.done %s207, 128
        $region32: #{tpu_custom_call.1} parent=27 // pred_fallthru
          _
        %s215 = sand.u32 %s77, 1
        %s216 = scalar_lea.sflag [#allocation6], %s215
        %s217 = sand.u32 %s77, 1
        %s218 = smul.addr %s217, 8
        %s219 = scalar_lea.vmem [#allocation5], %s218
        // Predicated region
        $region33: #{tpu_custom_call.1} parent=27 // pred_check
          %p220 = pneg %p90
        $region34: #{tpu_custom_call.1} parent=27 // pred_check_branch
          %222 = sbr.rel (%p220) target = $region36
        $region35: #{tpu_custom_call.1} parent=27 // pred_region
          %223 = dma.done %s216, 128
        $region36: #{tpu_custom_call.1} parent=27 // pred_fallthru
          _
        %s224 = sand.u32 %s49, 1
        %s225 = scalar_lea.sflag [#allocation3], %s224
        %s226 = sand.u32 %s49, 1
        %s227 = smul.addr %s226, 8
        %s228 = scalar_lea.vmem [#allocation2], %s227
        %p229 = pneg %p62
        %p230 = pneg %p59
        %s231 = sand.u32 %s77, 1
        %s232 = scalar_lea.sflag [#allocation6], %s231
        %s233 = sand.u32 %s77, 1
        %s234 = smul.addr %s233, 8
        %s235 = scalar_lea.vmem [#allocation5], %s234
        %p236 = pneg %p90
        %p237 = pneg %p87
        %p238 = pneg %p116
        %p239 = pneg %p113
        %s240 = sand.u32 %s103, 1
        %s241 = scalar_lea.sflag [#allocation4], %s240
        %s242 = sand.u32 %s103, 1
        %s243 = smul.addr %s242, 8
        %s244 = scalar_lea.vmem [#allocation7], %s243
        %p245 = pneg %p142
        %p246 = pneg %p139
        %s247 = sand.u32 %s129, 1
        %s248 = scalar_lea.sflag [#allocation9], %s247
        %s249 = sand.u32 %s129, 1
        %s250 = smul.addr %s249, 8
        %s251 = scalar_lea.vmem [#allocation8], %s250
        %s252 = sadd.s32 %s31, %s32
        %s253 = sadd.s32 %s31, %s32
        %p254 = scmp.eq.s32.totalorder %s32, 0
        // Predicated region
        $region37: #{tpu_custom_call.1} parent=27 // pred_check
          %p255 = pneg %p254
        $region38: #{tpu_custom_call.1} parent=27 // pred_check_branch
          %257 = sbr.rel (%p255) target = $region40
        $region39: #{tpu_custom_call.1} parent=27 // pred_region
          %258 = vst [vmem:[%s244] sm:$0xff] 0.0
          %259 = vst [vmem:[%s251] sm:$0xff] 0.0
        $region40: #{tpu_custom_call.1} parent=27 // pred_fallthru
          _
        %v260 = vld [vmem:[%s244] sm:$0xff]
        %v261 = vld [vmem:[%s210] sm:$0xff]
        %v262 = vadd.f32 %v261, 0.0
        %v263 = vadd.f32 %v260, %v262
        %264 = vst [vmem:[%s244] sm:$0xff] %v263
        %v265 = vld [vmem:[%s251] sm:$0xff]
        %v266 = vld [vmem:[%s219] sm:$0xff]
        %v267 = vadd.f32 %v266, 0.0
        %v268 = vadd.f32 %v265, %v267
        %269 = vst [vmem:[%s251] sm:$0xff] %v268
        %s270 = sand.u32 %s103, 1
        %s271 = scalar_lea.sflag [#allocation4], %s270
        %s272 = sand.u32 %s103, 1
        %s273 = smul.addr %s272, 8
        %s274 = scalar_lea.vmem [#allocation7], %s273
        %s275 = sand.u32 %s129, 1
        %s276 = scalar_lea.sflag [#allocation9], %s275
        %s277 = sand.u32 %s129, 1
        %s278 = smul.addr %s277, 8
        %s279 = scalar_lea.vmem [#allocation8], %s278
        // Predicated region
        $region41: #{tpu_custom_call.1} parent=27 // pred_check
          %p280 = pneg %p113
        $region42: #{tpu_custom_call.1} parent=27 // pred_check_branch
          %282 = sbr.rel (%p280) target = $region44
        $region43: #{tpu_custom_call.1} parent=27 // pred_region
          %s284 = ssub.s32 128, 128
          %285 = vsyncadd %s271, %s284
          %s286 = smul.addr %s31, 128
          %s287 = scalar_lea.hbm %s2, %s286
          %s289 = sshll.u32 %s274, 4
          %s290 = int_to_ptr.vmem [resolvable:$true] %s289
          %292 = dma.vmem_to_hbm [thread:$0]  %s290, 128, %s287, %s271
        $region44: #{tpu_custom_call.1} parent=27 // pred_fallthru
          _
        // Predicated region
        $region45: #{tpu_custom_call.1} parent=27 // pred_check
          %p293 = pneg %p139
        $region46: #{tpu_custom_call.1} parent=27 // pred_check_branch
          %295 = sbr.rel (%p293) target = $region48
        $region47: #{tpu_custom_call.1} parent=27 // pred_region
          %s297 = ssub.s32 128, 128
          %298 = vsyncadd %s276, %s297
          %s299 = smul.addr %s31, 128
          %s300 = scalar_lea.hbm %s3, %s299
          %s302 = sshll.u32 %s279, 4
          %s303 = int_to_ptr.vmem [resolvable:$true] %s302
          %305 = dma.vmem_to_hbm [thread:$0]  %s303, 128, %s300, %s276
        $region48: #{tpu_custom_call.1} parent=27 // pred_fallthru
          _
      $region28: #{tpu_custom_call.1} parent=5 // pred_fallthru
        _
      %p306 = scmp.le.s32.totalorder 2, %s22
      // Predicated region
      $region49: #{tpu_custom_call.1} parent=5 // pred_check
        %p307 = pneg %p306
      $region50: #{tpu_custom_call.1} parent=5 // pred_check_branch
        %309 = sbr.rel (%p307) target = $region52
      $region51: #{tpu_custom_call.1} parent=5 // pred_region
        %s310 = ssub.s32 %s22, 2
        // Predicated region
        $region53: #{tpu_custom_call.1} parent=51 // pred_check
          %p311 = pneg %p119
        $region54: #{tpu_custom_call.1} parent=51 // pred_check_branch
          %313 = sbr.rel (%p311) target = $region56
        $region55: #{tpu_custom_call.1} parent=51 // pred_region
          %s314 = sand.u32 %s104, 1
          %s315 = scalar_lea.sflag [#allocation4], %s314
          %s316 = sand.u32 %s104, 1
          %s317 = smul.addr %s316, 8
          %s318 = scalar_lea.vmem [#allocation7], %s317
          %319 = dma.done %s315, 128
        $region56: #{tpu_custom_call.1} parent=51 // pred_fallthru
          _
        // Predicated region
        $region57: #{tpu_custom_call.1} parent=51 // pred_check
          %p320 = pneg %p145
        $region58: #{tpu_custom_call.1} parent=51 // pred_check_branch
          %322 = sbr.rel (%p320) target = $region60
        $region59: #{tpu_custom_call.1} parent=51 // pred_region
          %s323 = sand.u32 %s130, 1
          %s324 = scalar_lea.sflag [#allocation9], %s323
          %s325 = sand.u32 %s130, 1
          %s326 = smul.addr %s325, 8
          %s327 = scalar_lea.vmem [#allocation8], %s326
          %328 = dma.done %s324, 128
        $region60: #{tpu_custom_call.1} parent=51 // pred_fallthru
          _
      $region52: #{tpu_custom_call.1} parent=5 // pred_fallthru
        _
    $region6: #{tpu_custom_call.1} parent=1 // loop_footer
      %s26 = sadd.s32 1, %s22
    $region7: #{tpu_custom_call.1} parent=1 // loop_footer_branch
      %21 = sbr.rel target = $region3
    $region8: #{tpu_custom_call.1} parent=1 // loop_exit
      _
    %329 = vsyncpa [#allocation3], 1
    %s330 = scalar_lea.sflag [#allocation3], 1
    %331 = vsyncpa %s330, 1
    %332 = vsyncpa [#allocation6], 1
    %s333 = scalar_lea.sflag [#allocation6], 1
    %334 = vsyncpa %s333, 1
    %335 = vsyncpa [#allocation4], 1
    %s336 = scalar_lea.sflag [#allocation4], 1
    %337 = vsyncpa %s336, 1
    %338 = vsyncpa [#allocation9], 1
    %s339 = scalar_lea.sflag [#allocation9], 1
    %340 = vsyncpa %s339, 1

</llo_original>
